<compile_context>
chip_gen: v5e
topology: v5e:2x2
jax: 0.10.0
libtpu: 0.0.40
codegen_flags: <defaults>
</compile_context>

<pallas_src>
import jax
import jax.numpy as jnp
from jax.experimental import pallas as pl
from jax.experimental.pallas import tpu as pltpu


# ---------------------------------------------------------------------------
# Kernel: identity copy of the current tile.
# ---------------------------------------------------------------------------
def _copy_kernel(x_ref, o_ref):
    o_ref[...] = x_ref[...]


# ---------------------------------------------------------------------------
# Helpers
# ---------------------------------------------------------------------------
def _resolve_view_size(in_shape, size):
    """Resolve a torch-style .view() size (supports a single -1)."""
    total = 1
    for s in in_shape:
        total *= int(s)
    size = tuple(int(s) for s in size)
    if size.count(-1) > 1:
        raise ValueError("only one dimension can be inferred")
    if -1 in size:
        known = 1
        for s in size:
            if s != -1:
                known *= s
        if known == 0 or total % known != 0:
            raise ValueError(f"cannot view shape {in_shape} as {size}")
        size = tuple(total // known if s == -1 else s for s in size)
    else:
        prod = 1
        for s in size:
            prod *= s
        if prod != total:
            raise ValueError(f"cannot view shape {in_shape} as {size}")
    return size


def _sublane_multiple(dtype):
    """Native sublane granularity: 8 for 32-bit, 16 for bf16, 32 for int8/fp8."""
    itemsize = jnp.dtype(dtype).itemsize
    return max(8, 32 // max(1, itemsize))


def _cdiv(a, b):
    return -(-a // b)


def _round_up(a, m):
    return _cdiv(a, m) * m


def _lane_dense_factor(total, sub, max_cols=8192):
    """Factor `total` into (rows, cols): cols a multiple of 128, rows a
    multiple of the dtype sublane granularity `sub` where possible.

    Returns None when `total` is not divisible by 128 (caller falls back to a
    pipelined 1-D tiling instead of a single giant block)."""
    best_aligned = None   # rows >= sub but rows % sub != 0
    best_small = None     # rows < sub (single full-extent block, tiny input)
    start = max_cols - (max_cols % 128)
    for cols in range(start, 0, -128):
        if total % cols == 0:
            rows = total // cols
            if rows >= sub and rows % sub == 0:
                return rows, cols
            if rows >= sub and best_aligned is None:
                best_aligned = (rows, cols)
            if rows < sub and best_small is None:
                best_small = (rows, cols)
    if best_aligned is not None:
        return best_aligned
    if best_small is not None:
        return best_small
    return None  # not divisible by 128 -> pipelined 1-D fallback


def _pick_block_rows(rows, cols, itemsize, sub, target_bytes=2 * 1024 * 1024):
    """Row-tile size: multiple of `sub`, <= ~target_bytes per block, prefers an
    exact divisor of `rows`, and capped so the grid has >= 2 steps (both v7x
    TensorCores drive their own DMA stream)."""
    if rows <= sub:
        return rows  # full-extent block (always legal)
    bytes_per_row = max(1, cols * itemsize)
    cap = max(sub, (target_bytes // bytes_per_row) // sub * sub)
    # >= 2 grid steps whenever there is more than one sublane-group of rows.
    cap = min(cap, _round_up(_cdiv(rows, 2), sub))
    cap = min(cap, rows)
    cap = max(cap - cap % sub, sub)
    # Prefer a block size that divides rows evenly (no masked trailing block).
    for cand in range(cap, sub - 1, -sub):
        if rows % cand == 0:
            return cand
    return cap


# ---------------------------------------------------------------------------
# Public wrapper
# ---------------------------------------------------------------------------
def pallas_view(x, size, *, materialize=False):
    """Equivalent of torch.Tensor.view(size) for a contiguous input.

    By default this is metadata-only (no kernel launch) — exactly the cost
    profile of .view().  Set materialize=True to produce an explicit copy via
    a tiled Pallas streaming kernel."""
    out_shape = _resolve_view_size(x.shape, size)

    if not materialize or x.size == 0:
        # .view() is metadata-only: no data movement, no pallas_call.
        return x.reshape(out_shape)

    total = int(x.size)
    itemsize = jnp.dtype(x.dtype).itemsize
    sub = _sublane_multiple(x.dtype)
    target_bytes = 2 * 1024 * 1024  # safe on v5e/v6e/v7x VMEM budgets
    compiler_params = pltpu.CompilerParams(
        dimension_semantics=("parallel",),   # shard grid across v7x's 2 TCs
        vmem_limit_bytes=32 * 1024 * 1024,   # explicit budget (v7x: 64 MiB phys)
    )
    cost = pl.CostEstimate(
        flops=0, transcendentals=0, bytes_accessed=2 * total * itemsize
    )

    factored = _lane_dense_factor(total, sub)

    if factored is not None:
        # Lane-dense 2-D slab, unmasked (sub,128)-aligned tiles.
        rows, cols = factored
        block_rows = _pick_block_rows(rows, cols, itemsize, sub, target_bytes)
        grid = (pl.cdiv(rows, block_rows),)
        x2d = x.reshape(rows, cols)  # metadata-only flatten
        out2d = pl.pallas_call(
            _copy_kernel,
            out_shape=jax.ShapeDtypeStruct((rows, cols), x.dtype),
            grid=grid,
            in_specs=[pl.BlockSpec((block_rows, cols), lambda i: (i, 0))],
            out_specs=pl.BlockSpec((block_rows, cols), lambda i: (i, 0)),
            compiler_params=compiler_params,
            cost_estimate=cost,
        )(x2d)
        return out2d.reshape(out_shape)

    # total not divisible by 128: pipelined 1-D tiling along the lane axis.
    # Last (partial) tile is masked automatically; still double-buffered.
    tile_cols = max(128, (target_bytes // itemsize) // 128 * 128)
    tile_cols = min(tile_cols, _round_up(_cdiv(total, 2), 128))  # >= 2 steps
    grid = (pl.cdiv(total, tile_cols),)
    x1d = x.reshape(1, total)
    out1d = pl.pallas_call(
        _copy_kernel,
        out_shape=jax.ShapeDtypeStruct((1, total), x.dtype),
        grid=grid,
        in_specs=[pl.BlockSpec((1, tile_cols), lambda i: (0, i))],
        out_specs=pl.BlockSpec((1, tile_cols), lambda i: (0, i)),
        compiler_params=compiler_params,
        cost_estimate=cost,
    )(x1d)
    return out1d.reshape(out_shape)


if __name__ == "__main__":
    key = jax.random.PRNGKey(0)

    # Typical controlVAE usage: View((-1, C*H*W)) to flatten conv features.
    B, C, H, W = 2, 4, 16, 16
    x = jax.random.normal(key, (B, C, H, W), dtype=jnp.float32)  # NCHW
    target_size = (-1, C * H * W)
    ref = x.reshape(B, C * H * W)

    # 1) Default path: free metadata reshape (matches .view() semantics/cost).
    out_free = pallas_view(x, target_size)

    # 2) Explicit materialized copy through the Pallas kernel
    #    (2048 elems -> lane-dense (8, 256) slab, single aligned block).
    out_copy = pallas_view(x, target_size, materialize=True)

    out_free, out_copy = jax.block_until_ready((out_free, out_copy))
    assert out_free.shape == (B, C * H * W) and out_copy.shape == (B, C * H * W)
    assert out_copy.dtype == x.dtype
    assert bool(jnp.all(out_free == ref))
    assert bool(jnp.all(out_copy == ref))

    # 3) Larger input to exercise the multi-block pipelined path
    #    (8 MiB f32 -> (256, 8192) slab, 64-row blocks, grid=(4,)).
    x2 = jax.random.normal(jax.random.PRNGKey(0), (32, 4, 128, 128), jnp.float32)
    out2 = pallas_view(x2, (-1, 4 * 128 * 128), materialize=True)
    out2 = jax.block_until_ready(out2)
    assert out2.shape == (32, 4 * 128 * 128)
    assert bool(jnp.all(out2 == x2.reshape(32, 4 * 128 * 128)))

    # 4) bf16 input: dtype-aware sublane multiple (16) -> (16, 256) slab.
    x3 = jax.random.normal(jax.random.PRNGKey(0), (4, 4, 16, 16), jnp.bfloat16)
    out3 = pallas_view(x3, (-1, 4 * 16 * 16), materialize=True)
    out3 = jax.block_until_ready(out3)
    assert out3.shape == (4, 4 * 16 * 16) and out3.dtype == jnp.bfloat16
    assert bool(jnp.all(out3 == x3.reshape(4, 4 * 16 * 16)))

    # 5) Total not divisible by 128: pipelined 1-D fallback (masked last tile).
    x4 = jax.random.normal(jax.random.PRNGKey(0), (2, 3, 5, 7), jnp.float32)
    out4 = pallas_view(x4, (-1, 5 * 7), materialize=True)
    out4 = jax.block_until_ready(out4)
    assert out4.shape == (6, 35)
    assert bool(jnp.all(out4 == x4.reshape(6, 35)))

    print("KERNEL_OK")
</pallas_src>

<mosaic_0001>
module attributes {stable_mosaic.version = 11 : i64} {
  func.func @_copy_kernel(%arg0: i32, %arg1: memref<8x256xf32, #tpu.memory_space<vmem>>, %arg2: memref<8x256xf32, #tpu.memory_space<vmem>>) attributes {dimension_semantics = [#tpu.dimension_semantics<parallel>], iteration_bounds = array<i64: 1>, scalar_prefetch = 0 : i64, scratch_operands = 0 : i64, tpu.core_type = #tpu.core_type<tc>, window_params = [{transform_indices = @transform_0, window_bounds = array<i64: 8, 256>}, {transform_indices = @transform_1, window_bounds = array<i64: 8, 256>}]} {
    %c0 = arith.constant 0 : index
    %c0_0 = arith.constant 0 : index
    %0 = vector.load %arg1[%c0, %c0_0] : memref<8x256xf32, #tpu.memory_space<vmem>>, vector<8x256xf32>
    %c0_1 = arith.constant 0 : index
    %c0_2 = arith.constant 0 : index
    %1 = vector.load %arg2[%c0_1, %c0_2] : memref<8x256xf32, #tpu.memory_space<vmem>>, vector<8x256xf32>
    tpu.vector_store %arg2[%c0_1, %c0_2], %0 {strides = array<i32>} : memref<8x256xf32, #tpu.memory_space<vmem>>, vector<8x256xf32>,
    return
  }
  func.func @transform_0(%arg0: i32) -> (i32, i32) {
    %c0_i32 = arith.constant 0 : i32
    %c0_i32_0 = arith.constant 0 : i32
    return %arg0, %c0_i32 : i32, i32
  }
  func.func @transform_1(%arg0: i32) -> (i32, i32) {
    %c0_i32 = arith.constant 0 : i32
    %c0_i32_0 = arith.constant 0 : i32
    return %arg0, %c0_i32 : i32, i32
  }
}

</mosaic_0001>

<llo_original>
// kernel: tpu_custom_call.1
$region0: #{tpu_custom_call.1}
  #allocation0 [shape = 'u32[]', space=smem, size = 0x4, offset = 0x4, fixed_abs, tag = 'smem constant byte address 0x4 - core index']
  #allocation1 [shape = 'u32[72,128]{1,0:T(1,128)}', space=vmem, size = 0x9000, scoped, tag = 'internal scratch']
  %s0 = inlined_call_operand.hbm [shape: f32[8,256], index: 0, kind: input, shape index: {}]
  %s1 = inlined_call_operand.hbm [shape: f32[8,256], index: 1, kind: output, shape index: {}]
  %s2 = sld [smem:[#allocation0]]
  $region18: #{tpu_custom_call.1} parent=0
    _
  %s4 = ssub.s32 1, %s2
  %s5 = scalar_select 0, %s4, %s2
  $region1: #{tpu_custom_call.1} parent=0
    #allocation2 [shape = 'u8[8192]{0}', space=vmem, size = 0x2000, scoped, tag = 'input window, operand 0, single buffered']
    #allocation3 [shape = 's32[1]{0}', space=sflag, size = 0x4, scoped, tag = 'scoped memory for tpu_custom_call.1']
    #allocation4 [shape = 's32[1]{0}', space=sflag, size = 0x4, scoped, tag = 'scoped memory for tpu_custom_call.1']
    #allocation5 [shape = 'u8[8192]{0}', space=vmem, size = 0x2000, scoped, tag = 'output window, operand 0, single buffered']
    %6 = vsyncpa [#allocation3], 0
    %7 = vsyncpa [#allocation4], 0
    // Predicated region
    $region2: #{tpu_custom_call.1} parent=1 // pred_check
      _
    $region3: #{tpu_custom_call.1} parent=1 // pred_check_branch
      %9 = sbr.rel (0) target = $region5
    $region4: #{tpu_custom_call.1} parent=1 // pred_region
      %11 = vsyncadd [#allocation3], 0
      %s13 = sshll.u32 %s0, 4
      %s14 = int_to_ptr.hbm [resolvable:$true] %s13
      %s15 = sshll.u32 [#allocation2], 4
      %s16 = int_to_ptr.vmem [resolvable:$true] %s15
      %18 = dma.hbm_to_vmem [thread:$0]  %s14, 256, %s16, [#allocation3]
    $region5: #{tpu_custom_call.1} parent=1 // pred_fallthru
      _
    // Predicated region
    $region6: #{tpu_custom_call.1} parent=1 // pred_check
      _
    $region7: #{tpu_custom_call.1} parent=1 // pred_check_branch
      %20 = sbr.rel (0) target = $region9
    $region8: #{tpu_custom_call.1} parent=1 // pred_region
      %22 = dma.done [#allocation3], 256
    $region9: #{tpu_custom_call.1} parent=1 // pred_fallthru
      _
    %v23 = vld [vmem:[#allocation2] sm:$0xff]
    %v24 = vld [vmem:[#allocation2 + $0x8] sm:$0xff]
    %25 = vst [vmem:[#allocation5] sm:$0xff] %v23
    %26 = vst [vmem:[#allocation5 + $0x8] sm:$0xff] %v24
    // Predicated region
    $region10: #{tpu_custom_call.1} parent=1 // pred_check
      _
    $region11: #{tpu_custom_call.1} parent=1 // pred_check_branch
      %28 = sbr.rel (0) target = $region13
    $region12: #{tpu_custom_call.1} parent=1 // pred_region
      %30 = vsyncadd [#allocation4], 0
      %s32 = sshll.u32 [#allocation5], 4
      %s33 = int_to_ptr.vmem [resolvable:$true] %s32
      %s34 = sshll.u32 %s1, 4
      %s35 = int_to_ptr.hbm [resolvable:$true] %s34
      %37 = dma.vmem_to_hbm [thread:$0]  %s33, 256, %s35, [#allocation4]
    $region13: #{tpu_custom_call.1} parent=1 // pred_fallthru
      _
    // Predicated region
    $region14: #{tpu_custom_call.1} parent=1 // pred_check
      _
    $region15: #{tpu_custom_call.1} parent=1 // pred_check_branch
      %39 = sbr.rel (0) target = $region17
    $region16: #{tpu_custom_call.1} parent=1 // pred_region
      %41 = dma.done [#allocation4], 256
    $region17: #{tpu_custom_call.1} parent=1 // pred_fallthru
      _
    %42 = vsyncpa [#allocation3], 1
    %43 = vsyncpa [#allocation4], 1

</llo_original>
